<compile_context>
chip_gen: v6e
topology: v6e:2x2x1
jax: 0.10.0
libtpu: 0.0.40
codegen_flags: <defaults>
</compile_context>

<pallas_src>
import functools
import math

import jax
import jax.numpy as jnp
from jax import lax
from jax.experimental import pallas as pl
from jax.experimental.pallas import tpu as pltpu


def _pick_tile(n, candidates=(512, 256, 128, 64, 32, 16, 8)):
    """Largest candidate tile that evenly divides n (falls back to n)."""
    for c in candidates:
        if c <= n and n % c == 0:
            return c
    return n


# ----------------------------------------------------------------------------
# Linear (GEMM + bias) kernel: y = x @ W + b, tiled over rows and out-columns.
# K (the contraction dim = d_embed) stays resident, which is fine for SD-sized
# embeddings, especially with bf16 weights.
# ----------------------------------------------------------------------------
def _linear_kernel(x_ref, w_ref, b_ref, o_ref, *, compute_dtype):
    x = x_ref[...].astype(compute_dtype)
    y = jnp.dot(x, w_ref[...], preferred_element_type=jnp.float32)
    y = y + b_ref[...].astype(jnp.float32)
    o_ref[...] = y.astype(o_ref.dtype)


def _linear(x2d, w, b, *, out_dtype, compute_dtype, block_rows=None):
    R, K = x2d.shape
    Kw, N = w.shape
    assert K == Kw
    tm = block_rows or _pick_tile(R)
    # Lane-dense output tiles: multiples of 128 if possible, else full N.
    tn = _pick_tile(N, (2048, 1024, 512, 256, 128))

    cost = pl.CostEstimate(
        flops=2 * R * K * N,
        transcendentals=0,
        bytes_accessed=(R * K * jnp.dtype(x2d.dtype).itemsize
                        + K * N * jnp.dtype(w.dtype).itemsize
                        + R * N * jnp.dtype(out_dtype).itemsize),
    )

    return pl.pallas_call(
        functools.partial(_linear_kernel, compute_dtype=compute_dtype),
        out_shape=jax.ShapeDtypeStruct((R, N), out_dtype),
        grid=(R // tm, N // tn),
        in_specs=[
            pl.BlockSpec((tm, K), lambda i, j: (i, 0)),   # activations
            pl.BlockSpec((K, tn), lambda i, j: (0, j)),   # weight column tile
            pl.BlockSpec((1, tn), lambda i, j: (0, j)),   # bias column tile
        ],
        out_specs=pl.BlockSpec((tm, tn), lambda i, j: (i, j)),
        compiler_params=pltpu.CompilerParams(
            dimension_semantics=("parallel", "parallel")),
        cost_estimate=cost,
    )(x2d, w, b)


# ----------------------------------------------------------------------------
# Flash attention kernel: one (batch*head, q-tile, kv-tile) per grid step.
# ----------------------------------------------------------------------------
def _flash_attn_kernel(q_ref, k_ref, v_ref, o_ref, m_scr, l_scr, acc_scr, *,
                       scale, causal, compute_dtype, use_approx_recip):
    q_idx = pl.program_id(1)
    kv_idx = pl.program_id(2)

    @pl.when(kv_idx == 0)
    def _init():
        m_scr[...] = jnp.full_like(m_scr, -jnp.inf)
        l_scr[...] = jnp.zeros_like(l_scr)
        acc_scr[...] = jnp.zeros_like(acc_scr)

    def _compute():
        blk_q, _ = q_ref.shape[1], q_ref.shape[2]
        blk_k = k_ref.shape[1]

        # Pre-scale q (tq x d_head) instead of the (tq x tk) score tile.
        q = (q_ref[0].astype(jnp.float32) * scale).astype(compute_dtype)
        k = k_ref[0].astype(compute_dtype)
        v = v_ref[0].astype(compute_dtype)

        # s = q @ k^T  (f32 accumulation on the MXU).
        s = lax.dot_general(q, k, (((1,), (1,)), ((), ())),
                            preferred_element_type=jnp.float32)

        if causal:
            # Per-tile (tq x tk) mask; diagonal kept, so every row of a
            # computed (kv_idx <= q_idx) tile has >=1 unmasked element.
            q_pos = q_idx * blk_q + lax.broadcasted_iota(
                jnp.int32, (blk_q, blk_k), 0)
            k_pos = kv_idx * blk_k + lax.broadcasted_iota(
                jnp.int32, (blk_q, blk_k), 1)
            s = jnp.where(k_pos > q_pos, -jnp.inf, s)

        m_prev = m_scr[...]
        m_curr = jnp.max(s, axis=-1, keepdims=True)
        m_next = jnp.maximum(m_prev, m_curr)
        alpha = jnp.exp(m_prev - m_next)
        p = jnp.exp(s - m_next)                         # f32 (VPU/EUP)

        l_scr[...] = alpha * l_scr[...] + jnp.sum(p, axis=-1, keepdims=True)
        acc_scr[...] = alpha * acc_scr[...] + jnp.dot(
            p.astype(compute_dtype), v, preferred_element_type=jnp.float32)
        m_scr[...] = m_next

    if causal:
        # block_q == block_kv and aligned => tiles with kv_idx > q_idx are
        # fully masked: skip their MXU/EUP work entirely (DMA is also elided
        # via the clamped k/v index_map below).
        pl.when(kv_idx <= q_idx)(_compute)
    else:
        _compute()

    @pl.when(kv_idx == pl.num_programs(2) - 1)
    def _finalize():
        l = l_scr[...]
        inv_l = pl.reciprocal(l, approx=True) if use_approx_recip else 1.0 / l
        o_ref[0] = (acc_scr[...] * inv_l).astype(o_ref.dtype)


def _flash_attention(q, k, v, *, scale, causal, compute_dtype, out_dtype,
                     block=None):
    BH, S, d_head = q.shape
    # Equal q/kv tiles keep the causal skip logic simple and avoid
    # fully-masked softmax rows inside computed tiles.
    blk = block or _pick_tile(S, (256, 128, 64, 32, 16, 8))
    n_q = S // blk
    n_kv = S // blk
    use_approx = jnp.dtype(compute_dtype) != jnp.dtype(jnp.float32)

    if causal:
        # For fully-masked tiles (ki > qi) keep the block index pinned at the
        # diagonal block: the block index does not change, so Pallas skips the
        # k/v DMA for those (compute-skipped) steps.
        kv_map = lambda b, qi, ki: (b, jnp.minimum(ki, qi), 0)
    else:
        kv_map = lambda b, qi, ki: (b, ki, 0)

    itemsize = jnp.dtype(q.dtype).itemsize
    cost = pl.CostEstimate(
        flops=4 * BH * S * S * d_head,
        transcendentals=BH * S * S,
        bytes_accessed=(3 * BH * S * d_head * itemsize
                        + BH * S * d_head * jnp.dtype(out_dtype).itemsize),
    )

    kernel = functools.partial(
        _flash_attn_kernel, scale=scale, causal=causal,
        compute_dtype=compute_dtype, use_approx_recip=use_approx)

    return pl.pallas_call(
        kernel,
        out_shape=jax.ShapeDtypeStruct((BH, S, d_head), out_dtype),
        grid=(BH, n_q, n_kv),
        in_specs=[
            pl.BlockSpec((1, blk, d_head), lambda b, qi, ki: (b, qi, 0)),  # q
            pl.BlockSpec((1, blk, d_head), kv_map),                        # k
            pl.BlockSpec((1, blk, d_head), kv_map),                        # v
        ],
        out_specs=pl.BlockSpec((1, blk, d_head), lambda b, qi, ki: (b, qi, 0)),
        scratch_shapes=[
            pltpu.VMEM((blk, 1), jnp.float32),       # running max   m
            pltpu.VMEM((blk, 1), jnp.float32),       # running denom l
            pltpu.VMEM((blk, d_head), jnp.float32),  # output accumulator
        ],
        compiler_params=pltpu.CompilerParams(
            dimension_semantics=("parallel", "parallel", "arbitrary")),
        cost_estimate=cost,
    )(q, k, v)


# ----------------------------------------------------------------------------
# Full SelfAttention forward.
# ----------------------------------------------------------------------------
def self_attention(x, w_in, b_in, w_out, b_out, *, n_heads, causal_mask=False,
                   compute_dtype=jnp.bfloat16, block=None):
    B, S, D = x.shape
    assert D % n_heads == 0
    d_head = D // n_heads

    # Weights in compute dtype (halves VMEM/DMA in bf16 mode); biases stay f32
    # since they are added after f32 accumulation.
    w_in_c = w_in.astype(compute_dtype)
    w_out_c = w_out.astype(compute_dtype)

    # 1) in_proj
    qkv = _linear(x.reshape(B * S, D), w_in_c, b_in,
                  out_dtype=compute_dtype, compute_dtype=compute_dtype)

    # Layout plumbing (no compute): (B, S, 3, H, dh) -> (B*H, S, dh).
    qkv = qkv.reshape(B, S, 3, n_heads, d_head)
    q = jnp.transpose(qkv[:, :, 0], (0, 2, 1, 3)).reshape(B * n_heads, S, d_head)
    k = jnp.transpose(qkv[:, :, 1], (0, 2, 1, 3)).reshape(B * n_heads, S, d_head)
    v = jnp.transpose(qkv[:, :, 2], (0, 2, 1, 3)).reshape(B * n_heads, S, d_head)

    # 2) flash attention
    attn = _flash_attention(q, k, v, scale=1.0 / math.sqrt(d_head),
                            causal=causal_mask, compute_dtype=compute_dtype,
                            out_dtype=compute_dtype, block=block)

    # (B*H, S, dh) -> (B*S, D)
    attn = jnp.transpose(attn.reshape(B, n_heads, S, d_head),
                         (0, 2, 1, 3)).reshape(B * S, D)

    # 3) out_proj
    out = _linear(attn, w_out_c, b_out,
                  out_dtype=x.dtype, compute_dtype=compute_dtype)
    return out.reshape(B, S, D)


def self_attention_ref(x, w_in, b_in, w_out, b_out, *, n_heads,
                       causal_mask=False):
    """Pure-JAX f32 reference mirroring the PyTorch forward."""
    B, S, D = x.shape
    d_head = D // n_heads
    qkv = x @ w_in + b_in[0]
    q, k, v = jnp.split(qkv, 3, axis=-1)
    q = q.reshape(B, S, n_heads, d_head).transpose(0, 2, 1, 3)
    k = k.reshape(B, S, n_heads, d_head).transpose(0, 2, 1, 3)
    v = v.reshape(B, S, n_heads, d_head).transpose(0, 2, 1, 3)
    w = q @ jnp.swapaxes(k, -1, -2)
    if causal_mask:
        mask = jnp.triu(jnp.ones((S, S), bool), 1)
        w = jnp.where(mask, -jnp.inf, w)
    w = w / math.sqrt(d_head)
    w = jax.nn.softmax(w, axis=-1)
    out = (w @ v).transpose(0, 2, 1, 3).reshape(B, S, D)
    return out @ w_out + b_out[0]


if __name__ == "__main__":
    B, S, D = 2, 8, 32
    n_heads = 4

    key = jax.random.PRNGKey(0)
    kx, kwi, kbi, kwo, kbo = jax.random.split(key, 5)

    x = jax.random.normal(kx, (B, S, D), dtype=jnp.float32)
    bound = 1.0 / math.sqrt(D)
    w_in = jax.random.uniform(kwi, (D, 3 * D), jnp.float32, -bound, bound)
    b_in = jax.random.uniform(kbi, (1, 3 * D), jnp.float32, -bound, bound)
    w_out = jax.random.uniform(kwo, (D, D), jnp.float32, -bound, bound)
    b_out = jax.random.uniform(kbo, (1, D), jnp.float32, -bound, bound)

    for causal in (False, True):
        ref = self_attention_ref(x, w_in, b_in, w_out, b_out,
                                 n_heads=n_heads, causal_mask=causal)

        # Exact path (f32 MXU operands): tight tolerance.
        out_f32 = self_attention(x, w_in, b_in, w_out, b_out,
                                 n_heads=n_heads, causal_mask=causal,
                                 compute_dtype=jnp.float32)
        jax.block_until_ready(out_f32)
        assert jnp.allclose(out_f32, ref, atol=1e-4, rtol=1e-4), \
            f"f32 mismatch (causal={causal})"

        # Fast path (bf16 MXU operands, f32 accumulation): loose tolerance.
        out_bf16 = self_attention(x, w_in, b_in, w_out, b_out,
                                  n_heads=n_heads, causal_mask=causal,
                                  compute_dtype=jnp.bfloat16)
        jax.block_until_ready(out_bf16)
        assert jnp.allclose(out_bf16, ref, atol=5e-2, rtol=5e-2), \
            f"bf16 mismatch (causal={causal})"

    print("KERNEL_OK")
</pallas_src>

<mosaic_0001>
module attributes {stable_mosaic.version = 11 : i64} {
  func.func @_linear_kernel(%arg0: i32, %arg1: i32, %arg2: memref<16x32xf32, #tpu.memory_space<vmem>>, %arg3: memref<32x96xf32, #tpu.memory_space<vmem>>, %arg4: memref<1x96xf32, #tpu.memory_space<vmem>>, %arg5: memref<16x96xf32, #tpu.memory_space<vmem>>) attributes {dimension_semantics = [#tpu.dimension_semantics<parallel>, #tpu.dimension_semantics<parallel>], iteration_bounds = array<i64: 1, 1>, scalar_prefetch = 0 : i64, scratch_operands = 0 : i64, tpu.core_type = #tpu.core_type<tc>, window_params = [{transform_indices = @transform_0, window_bounds = array<i64: 16, 32>}, {transform_indices = @transform_1, window_bounds = array<i64: 32, 96>}, {transform_indices = @transform_2, window_bounds = array<i64: 1, 96>}, {transform_indices = @transform_3, window_bounds = array<i64: 16, 96>}]} {
    %c0 = arith.constant 0 : index
    %c0_0 = arith.constant 0 : index
    %0 = vector.load %arg2[%c0, %c0_0] : memref<16x32xf32, #tpu.memory_space<vmem>>, vector<16x32xf32>
    %c0_1 = arith.constant 0 : index
    %c0_2 = arith.constant 0 : index
    %1 = vector.load %arg3[%c0_1, %c0_2] : memref<32x96xf32, #tpu.memory_space<vmem>>, vector<32x96xf32>
    %cst = arith.constant dense<0.000000e+00> : vector<16x96xf32>
    %2 = tpu.matmul %0, %1, %cst {dimension_numbers = #tpu.dot_dimension_numbers<[1], [0], [0], [1], [0, 0, 1, 1], [], []>} : vector<16x32xf32>, vector<32x96xf32>, vector<16x96xf32> -> vector<16x96xf32>
    %c0_3 = arith.constant 0 : index
    %c0_4 = arith.constant 0 : index
    %3 = vector.load %arg4[%c0_3, %c0_4] : memref<1x96xf32, #tpu.memory_space<vmem>>, vector<1x96xf32>
    %4 = vector.broadcast %3 : vector<1x96xf32> to vector<16x96xf32>
    %5 = arith.addf %2, %4 : vector<16x96xf32>
    %c0_5 = arith.constant 0 : index
    %c0_6 = arith.constant 0 : index
    %6 = vector.load %arg5[%c0_5, %c0_6] : memref<16x96xf32, #tpu.memory_space<vmem>>, vector<16x96xf32>
    tpu.vector_store %arg5[%c0_5, %c0_6], %5 {strides = array<i32>} : memref<16x96xf32, #tpu.memory_space<vmem>>, vector<16x96xf32>,
    return
  }
  func.func @transform_0(%arg0: i32, %arg1: i32) -> (i32, i32) {
    %c0_i32 = arith.constant 0 : i32
    %c0_i32_0 = arith.constant 0 : i32
    return %arg0, %c0_i32 : i32, i32
  }
  func.func @transform_1(%arg0: i32, %arg1: i32) -> (i32, i32) {
    %c0_i32 = arith.constant 0 : i32
    %c0_i32_0 = arith.constant 0 : i32
    return %c0_i32, %arg1 : i32, i32
  }
  func.func @transform_2(%arg0: i32, %arg1: i32) -> (i32, i32) {
    %c0_i32 = arith.constant 0 : i32
    %c0_i32_0 = arith.constant 0 : i32
    return %c0_i32, %arg1 : i32, i32
  }
  func.func @transform_3(%arg0: i32, %arg1: i32) -> (i32, i32) {
    %c0_i32 = arith.constant 0 : i32
    return %arg0, %arg1 : i32, i32
  }
}

</mosaic_0001>

<llo_original>
// kernel: tpu_custom_call.1
$region0: #{tpu_custom_call.1}
  #allocation0 [shape = 'u32[]', space=smem, size = 0x4, offset = 0x4, fixed_abs, tag = 'smem constant byte address 0x4 - core index']
  #allocation1 [shape = 'u32[144,128]{1,0:T(1,128)}', space=vmem, size = 0x12000, scoped, tag = 'internal scratch']
  %s0 = inlined_call_operand.hbm [shape: f32[16,32], index: 0, kind: input, shape index: {}]
  %s1 = inlined_call_operand.hbm [shape: f32[32,96], index: 1, kind: input, shape index: {}]
  %s2 = inlined_call_operand.vmem [shape: f32[1,96], index: 2, kind: input, shape index: {}]
  %s3 = inlined_call_operand.hbm [shape: f32[16,96], index: 3, kind: output, shape index: {}]
  %s4 = sld [smem:[#allocation0]]
  $region30: #{tpu_custom_call.1} parent=0
    _
  %s6 = ssub.s32 1, %s4
  %s7 = scalar_select 0, %s6, %s4
  $region1: #{tpu_custom_call.1} parent=0
    #allocation2 [shape = 'u8[8192]{0}', space=vmem, size = 0x2000, scoped, tag = 'input window, operand 0, single buffered']
    #allocation3 [shape = 's32[1]{0}', space=sflag, size = 0x4, scoped, tag = 'scoped memory for tpu_custom_call.1']
    #allocation4 [shape = 's32[1]{0}', space=sflag, size = 0x4, scoped, tag = 'scoped memory for tpu_custom_call.1']
    #allocation5 [shape = 'u8[16384]{0}', space=vmem, size = 0x4000, scoped, tag = 'input window, operand 1, single buffered']
    #allocation6 [shape = 's32[1]{0}', space=sflag, size = 0x4, scoped, tag = 'scoped memory for tpu_custom_call.1']
    #allocation7 [shape = 'u8[8192]{0}', space=vmem, size = 0x2000, scoped, tag = 'output window, operand 0, single buffered']
    %8 = vsyncpa [#allocation3], 0
    %9 = vsyncpa [#allocation6], 0
    %10 = vsyncpa [#allocation4], 0
    // Predicated region
    $region2: #{tpu_custom_call.1} parent=1 // pred_check
      _
    $region3: #{tpu_custom_call.1} parent=1 // pred_check_branch
      %12 = sbr.rel (0) target = $region5
    $region4: #{tpu_custom_call.1} parent=1 // pred_region
      %s14 = ssub.s32 256, 256
      %15 = vsyncadd [#allocation3], %s14
      %s16 = sshll.u32 [#allocation2], 4
      %s17 = int_to_ptr.vmem [resolvable:$true] %s16
      %22 = dma.hbm_to_vmem [thread:$0]  %s0, 256, %s17, [#allocation3], 128, 128, 8
    $region5: #{tpu_custom_call.1} parent=1 // pred_fallthru
      _
    // Predicated region
    $region6: #{tpu_custom_call.1} parent=1 // pred_check
      _
    $region7: #{tpu_custom_call.1} parent=1 // pred_check_branch
      %24 = sbr.rel (0) target = $region9
    $region8: #{tpu_custom_call.1} parent=1 // pred_region
      %s26 = ssub.s32 512, 512
      %27 = vsyncadd [#allocation6], %s26
      %s28 = sshll.u32 [#allocation5], 4
      %s29 = int_to_ptr.vmem [resolvable:$true] %s28
      %34 = dma.hbm_to_vmem [thread:$0]  %s1, 512, %s29, [#allocation6], 128, 128, 8
    $region9: #{tpu_custom_call.1} parent=1 // pred_fallthru
      _
    // Predicated region
    $region10: #{tpu_custom_call.1} parent=1 // pred_check
      _
    $region11: #{tpu_custom_call.1} parent=1 // pred_check_branch
      %36 = sbr.rel (0) target = $region13
    $region12: #{tpu_custom_call.1} parent=1 // pred_region
      _
    $region13: #{tpu_custom_call.1} parent=1 // pred_fallthru
      _
    // Predicated region
    $region14: #{tpu_custom_call.1} parent=1 // pred_check
      _
    $region15: #{tpu_custom_call.1} parent=1 // pred_check_branch
      %38 = sbr.rel (0) target = $region17
    $region16: #{tpu_custom_call.1} parent=1 // pred_region
      %39 = dma.done [#allocation3], 256
    $region17: #{tpu_custom_call.1} parent=1 // pred_fallthru
      _
    // Predicated region
    $region18: #{tpu_custom_call.1} parent=1 // pred_check
      _
    $region19: #{tpu_custom_call.1} parent=1 // pred_check_branch
      %41 = sbr.rel (0) target = $region21
    $region20: #{tpu_custom_call.1} parent=1 // pred_region
      %42 = dma.done [#allocation6], 512
    $region21: #{tpu_custom_call.1} parent=1 // pred_fallthru
      _
    %v43 = vld [vmem:[#allocation2] sm:$0xff]
    %v44 = vld [vmem:[#allocation2 + $0x8] sm:$0xff]
    %v45 = vld [vmem:[#allocation5] sm:$0xff]
    %v46 = vld [vmem:[#allocation5 + $0x8] sm:$0xff]
    %v47 = vld [vmem:[#allocation5 + $0x10] sm:$0xff]
    %v48 = vld [vmem:[#allocation5 + $0x18] sm:$0xff]
    %v49 = vld [vmem:[%s2] sm:$0x1]
    %v51 = vlaneseq
    %v52 = vshrl.u32 %v51, 7
    %v53 = vsub.s32 0, %v52
    %v54 = vrot.slane %v49, %v53
    %vm56 = vcmask 261120
    %v58 = vsel %vm56, %v43, 0
    %v61 = vsel %vm56, %v44, 0
    %63 = vmatprep.subr.mxu0 0.0
    %64 = vmatpush1.msra.mxu0 0.0
    %65 = vmatprep.subr.mxu0 0.0
    %66 = vmatpush1.msra.mxu0 0.0
    %67 = vmatprep.subr.mxu0 0.0
    %68 = vmatpush1.msra.mxu0 0.0
    %69 = vmatprep.subr.mxu0 0.0
    %70 = vmatpush1.msra.mxu0 0.0
    %71 = vmatprep.subr.mxu0 0.0
    %72 = vmatpush1.msra.mxu0 0.0
    %73 = vmatprep.subr.mxu0 0.0
    %74 = vmatpush1.msra.mxu0 0.0
    %75 = vmatprep.subr.mxu0 0.0
    %76 = vmatpush1.msra.mxu0 0.0
    %77 = vmatprep.subr.mxu0 0.0
    %78 = vmatpush1.msra.mxu0 0.0
    %79 = vmatprep.subr.mxu0 0.0
    %80 = vmatpush1.msra.mxu0 0.0
    %81 = vmatprep.subr.mxu0 0.0
    %82 = vmatpush1.msra.mxu0 0.0
    %83 = vmatprep.subr.mxu0 0.0
    %84 = vmatpush1.msra.mxu0 0.0
    %85 = vmatprep.subr.mxu0 0.0
    %86 = vmatpush1.msra.mxu0 0.0
    %87 = vmatprep.subr.mxu0 0.0
    %88 = vmatpush1.msra.mxu0 %v48
    %89 = vmatprep.subr.mxu0 0.0
    %90 = vmatpush1.msra.mxu0 %v47
    %91 = vmatprep.subr.mxu0 0.0
    %92 = vmatpush1.msra.mxu0 %v46
    %93 = vmatprep.subr.mxu0 0.0
    %94 = vmatpush1.msra.mxu0 %v45
    %95 = vmatprep.subr.mxu0 0.0
    %96 = vmatpush2.msra.mxu0 0.0
    %97 = vmatprep.subr.mxu0 0.0
    %98 = vmatpush2.msra.mxu0 0.0
    %99 = vmatprep.subr.mxu0 0.0
    %100 = vmatpush2.msra.mxu0 0.0
    %101 = vmatprep.subr.mxu0 0.0
    %102 = vmatpush2.msra.mxu0 0.0
    %103 = vmatprep.subr.mxu0 0.0
    %104 = vmatpush2.msra.mxu0 0.0
    %105 = vmatprep.subr.mxu0 0.0
    %106 = vmatpush2.msra.mxu0 0.0
    %107 = vmatprep.subr.mxu0 0.0
    %108 = vmatpush2.msra.mxu0 0.0
    %109 = vmatprep.subr.mxu0 0.0
    %110 = vmatpush2.msra.mxu0 0.0
    %111 = vmatprep.subr.mxu0 0.0
    %112 = vmatpush2.msra.mxu0 0.0
    %113 = vmatprep.subr.mxu0 0.0
    %114 = vmatpush2.msra.mxu0 0.0
    %115 = vmatprep.subr.mxu0 0.0
    %116 = vmatpush2.msra.mxu0 0.0
    %117 = vmatprep.subr.mxu0 0.0
    %118 = vmatpush2.msra.mxu0 0.0
    %119 = vmatprep.subr.mxu0 0.0
    %120 = vmatpush2.msra.mxu0 0.0
    %121 = vmatprep.subr.mxu0 0.0
    %122 = vmatpush2.msra.mxu0 0.0
    %123 = vmatprep.subr.mxu0 0.0
    %124 = vmatpush2.msra.mxu0 0.0
    %125 = vmatprep.subr.mxu0 0.0
    %126 = vmatpush2.msra.mxu0 0.0
    %127 = vmatprep.mubr.f32.mxu0 0.0
    %128 = vmatmul.mubr.f32.gmra.mxu0 %v58
    %v129 = vpop.f32.mrf.mxu0
    %v130 = vadd.f32 %v54, %v129
    %v131 = vpop.f32.mrf.mxu0
    %132 = vmatprep.mubr.f32.mxu0 0.0
    %133 = vmatmul.mubr.f32.gmra.mxu0 %v61
    %v134 = vpop.f32.mrf.mxu0
    %v135 = vadd.f32 %v54, %v134
    %v136 = vpop.f32.mrf.mxu0
    %137 = vdwg.mxu0
    %vm138 = vcmask 785408
    %139 = vst.msk [vmem:[#allocation7] sm:$0xff] %vm138, %v130
    %140 = vst.msk [vmem:[#allocation7 + $0x8] sm:$0xff] %vm138, %v135
    // Predicated region
    $region22: #{tpu_custom_call.1} parent=1 // pred_check
      _
    $region23: #{tpu_custom_call.1} parent=1 // pred_check_branch
      %142 = sbr.rel (0) target = $region25
    $region24: #{tpu_custom_call.1} parent=1 // pred_region
      %s144 = ssub.s32 256, 256
      %145 = vsyncadd [#allocation4], %s144
      %s146 = sshll.u32 [#allocation7], 4
      %s147 = int_to_ptr.vmem [resolvable:$true] %s146
      %152 = dma.vmem_to_hbm [thread:$0]  %s147, 256, %s3, [#allocation4], 128, 128, 8
    $region25: #{tpu_custom_call.1} parent=1 // pred_fallthru
      _
    // Predicated region
    $region26: #{tpu_custom_call.1} parent=1 // pred_check
      _
    $region27: #{tpu_custom_call.1} parent=1 // pred_check_branch
      %154 = sbr.rel (0) target = $region29
    $region28: #{tpu_custom_call.1} parent=1 // pred_region
      %155 = dma.done [#allocation4], 256
    $region29: #{tpu_custom_call.1} parent=1 // pred_fallthru
      _
    %156 = vsyncpa [#allocation3], 1
    %157 = vsyncpa [#allocation6], 1
    %158 = vsyncpa [#allocation4], 1

</llo_original>
